<compile_context>
chip_gen: v7x
topology: tpu7x:2x2x1
jax: 0.10.0
libtpu: 0.0.40
codegen_flags: <defaults>
</compile_context>

<pallas_src>
import functools

import jax
import jax.numpy as jnp
from jax.experimental import pallas as pl
from jax.experimental.pallas import tpu as pltpu


def _round_up(x, m):
    return ((x + m - 1) // m) * m


def actor_critic_kernel(x_ref, w1_ref, b1_ref, w2_ref, b2_ref,
                        wh_ref, bh_ref, out_ref, *, action_size):
    # fc1 + relu  (bf16 MXU matmul, f32 accumulate / elementwise)
    # NOTE: fc1's K=8 makes this matmul MXU-push-inefficient, but the kernel
    # is HBM-writeback-bound at large B, so we keep it on the MXU.
    x = x_ref[...].astype(jnp.bfloat16)
    h1 = jnp.dot(x, w1_ref[...], preferred_element_type=jnp.float32) + b1_ref[...]
    h1 = jnp.maximum(h1, 0.0)

    # fc2 + relu
    h2 = jnp.dot(h1.astype(jnp.bfloat16), w2_ref[...],
                 preferred_element_type=jnp.float32) + b2_ref[...]
    h2 = jnp.maximum(h2, 0.0)

    # fused heads: one lane-dense matmul. lanes [0:A) = actor logits,
    # lane A = critic value, lanes > A are zero-padded.
    head = jnp.dot(h2.astype(jnp.bfloat16), wh_ref[...],
                   preferred_element_type=jnp.float32) + bh_ref[...]

    # masked, numerically-stable softmax over the actor lanes only
    lane = jax.lax.broadcasted_iota(jnp.int32, head.shape, 1)
    is_action = lane < action_size
    m = jnp.max(jnp.where(is_action, head, -jnp.inf), axis=-1, keepdims=True)
    e = jnp.where(is_action, jnp.exp(head - m), 0.0)
    s = jnp.sum(e, axis=-1, keepdims=True)
    probs = e * pl.reciprocal(s, approx=True)  # EUP vrcp slot

    # single unmasked 128-wide bf16 store: probs in actor lanes, critic value
    # (and zero padding) passed through in the remaining lanes.
    out_ref[...] = jnp.where(is_action, probs, head).astype(out_ref.dtype)


def actor_critic_forward(x, params, *, action_size, max_tile_b=1024):
    """x: [B, state_size] float32. Returns (action_probs [B, A], values [B, 1])."""
    B, S = x.shape
    hidden = params["w1"].shape[1]
    head_w = params["wh"].shape[1]

    # Batch tiling: multiples of 16 (bf16 sublane tile), capped; weights stay
    # VMEM-resident. ceil(B/2) so large batches get >= 2 grid steps (both
    # v7x TensorCores); the partial last block is masked by Pallas.
    tile_b = min(max_tile_b, _round_up(pl.cdiv(B, 2), 16))
    grid = (pl.cdiv(B, tile_b),)

    kernel = functools.partial(actor_critic_kernel, action_size=action_size)

    out = pl.pallas_call(
        kernel,
        out_shape=jax.ShapeDtypeStruct((B, head_w), jnp.bfloat16),
        grid=grid,
        in_specs=[
            pl.BlockSpec((tile_b, S), lambda i: (i, 0)),          # x (batch tiled)
            pl.BlockSpec((S, hidden), lambda i: (0, 0)),          # w1 (resident)
            pl.BlockSpec((1, hidden), lambda i: (0, 0)),          # b1
            pl.BlockSpec((hidden, hidden), lambda i: (0, 0)),     # w2
            pl.BlockSpec((1, hidden), lambda i: (0, 0)),          # b2
            pl.BlockSpec((hidden, head_w), lambda i: (0, 0)),     # fused head W
            pl.BlockSpec((1, head_w), lambda i: (0, 0)),          # fused head b
        ],
        out_specs=pl.BlockSpec((tile_b, head_w), lambda i: (i, 0)),
        compiler_params=pltpu.CompilerParams(
            dimension_semantics=("parallel",)),  # shard batch across TCs on v7x
    )(x,
      params["w1"], params["b1"],
      params["w2"], params["b2"],
      params["wh"], params["bh"])

    probs = out[:, :action_size].astype(jnp.float32)
    values = out[:, action_size:action_size + 1].astype(jnp.float32)
    return probs, values


def init_params(key, state_size, action_size, hidden=128):
    """Deterministic init mimicking PyTorch nn.Linear (uniform +-1/sqrt(fan_in)).
    Weights are [in, out] bf16 (MXU-native); biases stay f32 (added after f32
    accumulation). Actor/critic heads are fused + zero-padded to a lane-dense
    [hidden, head_w] weight (head_w multiple of 128)."""
    def linear(key, fan_in, fan_out):
        kw, kb = jax.random.split(key)
        bound = 1.0 / jnp.sqrt(jnp.float32(fan_in))
        w = jax.random.uniform(kw, (fan_in, fan_out), jnp.float32, -bound, bound)
        b = jax.random.uniform(kb, (1, fan_out), jnp.float32, -bound, bound)
        return w, b

    k1, k2, k3, k4 = jax.random.split(key, 4)
    w1, b1 = linear(k1, state_size, hidden)
    w2, b2 = linear(k2, hidden, hidden)
    wa, ba = linear(k3, hidden, action_size)
    wc, bc = linear(k4, hidden, 1)

    head_w = _round_up(action_size + 1, 128)
    wh = jnp.zeros((hidden, head_w), jnp.float32)
    wh = wh.at[:, :action_size].set(wa)
    wh = wh.at[:, action_size:action_size + 1].set(wc)
    bh = jnp.zeros((1, head_w), jnp.float32)
    bh = bh.at[:, :action_size].set(ba)
    bh = bh.at[:, action_size:action_size + 1].set(bc)

    return {"w1": w1.astype(jnp.bfloat16), "b1": b1,
            "w2": w2.astype(jnp.bfloat16), "b2": b2,
            "wh": wh.astype(jnp.bfloat16), "bh": bh}


def reference_forward(x, params, action_size):
    """Pure-JAX f32 reference matching the PyTorch module semantics."""
    w1 = params["w1"].astype(jnp.float32)
    w2 = params["w2"].astype(jnp.float32)
    wh = params["wh"].astype(jnp.float32)
    h1 = jnp.maximum(x @ w1 + params["b1"], 0.0)
    h2 = jnp.maximum(h1 @ w2 + params["b2"], 0.0)
    logits = h2 @ wh[:, :action_size] + params["bh"][:, :action_size]
    probs = jax.nn.softmax(logits, axis=-1)
    values = (h2 @ wh[:, action_size:action_size + 1]
              + params["bh"][:, action_size:action_size + 1])
    return probs, values


if __name__ == "__main__":
    key = jax.random.PRNGKey(0)
    k_params, k_x = jax.random.split(key)

    batch = 2
    state_size = 8
    action_size = 4

    params = init_params(k_params, state_size, action_size)
    x = jax.random.normal(k_x, (batch, state_size), jnp.float32)

    fwd = jax.jit(functools.partial(actor_critic_forward,
                                    action_size=action_size))
    probs, values = fwd(x, params)
    jax.block_until_ready((probs, values))

    # sanity: shapes match the PyTorch module, softmax rows sum to 1 (within
    # bf16 / approx-reciprocal tolerance), and the kernel matches a pure-JAX
    # f32 reference forward pass at bf16-appropriate tolerance.
    assert probs.shape == (batch, action_size)
    assert values.shape == (batch, 1)
    assert jnp.allclose(jnp.sum(probs, axis=-1), 1.0, atol=2e-2)

    probs_ref, values_ref = reference_forward(x, params, action_size)
    assert jnp.allclose(probs, probs_ref, atol=2e-2, rtol=2e-2)
    assert jnp.allclose(values, values_ref, atol=2e-2, rtol=2e-2)

    print("KERNEL_OK")
</pallas_src>

<mosaic_0001>
module attributes {stable_mosaic.version = 11 : i64} {
  func.func @actor_critic_kernel(%arg0: i32, %arg1: memref<16x8xf32, #tpu.memory_space<vmem>>, %arg2: memref<8x128xbf16, #tpu.memory_space<vmem>>, %arg3: memref<1x128xf32, #tpu.memory_space<vmem>>, %arg4: memref<128x128xbf16, #tpu.memory_space<vmem>>, %arg5: memref<1x128xf32, #tpu.memory_space<vmem>>, %arg6: memref<128x128xbf16, #tpu.memory_space<vmem>>, %arg7: memref<1x128xf32, #tpu.memory_space<vmem>>, %arg8: memref<16x128xbf16, #tpu.memory_space<vmem>>) attributes {dimension_semantics = [#tpu.dimension_semantics<parallel>], iteration_bounds = array<i64: 1>, scalar_prefetch = 0 : i64, scratch_operands = 0 : i64, tpu.core_type = #tpu.core_type<tc>, window_params = [{transform_indices = @transform_0, window_bounds = array<i64: 16, 8>}, {pipeline_mode = #tpu.pipeline_mode<synchronous>, transform_indices = @transform_1, window_bounds = array<i64: 8, 128>}, {pipeline_mode = #tpu.pipeline_mode<synchronous>, transform_indices = @transform_2, window_bounds = array<i64: 1, 128>}, {pipeline_mode = #tpu.pipeline_mode<synchronous>, transform_indices = @transform_3, window_bounds = array<i64: 128, 128>}, {pipeline_mode = #tpu.pipeline_mode<synchronous>, transform_indices = @transform_4, window_bounds = array<i64: 1, 128>}, {pipeline_mode = #tpu.pipeline_mode<synchronous>, transform_indices = @transform_5, window_bounds = array<i64: 128, 128>}, {pipeline_mode = #tpu.pipeline_mode<synchronous>, transform_indices = @transform_6, window_bounds = array<i64: 1, 128>}, {transform_indices = @transform_7, window_bounds = array<i64: 16, 128>}]} {
    %c0 = arith.constant 0 : index
    %c0_0 = arith.constant 0 : index
    %0 = vector.load %arg1[%c0, %c0_0] : memref<16x8xf32, #tpu.memory_space<vmem>>, vector<16x8xf32>
    %1 = arith.truncf %0 : vector<16x8xf32> to vector<16x8xbf16>
    %c0_1 = arith.constant 0 : index
    %c0_2 = arith.constant 0 : index
    %2 = vector.load %arg2[%c0_1, %c0_2] : memref<8x128xbf16, #tpu.memory_space<vmem>>, vector<8x128xbf16>
    %cst = arith.constant dense<0.000000e+00> : vector<16x128xf32>
    %3 = tpu.matmul %1, %2, %cst {dimension_numbers = #tpu.dot_dimension_numbers<[1], [0], [0], [1], [0, 0, 1, 1], [], []>} : vector<16x8xbf16>, vector<8x128xbf16>, vector<16x128xf32> -> vector<16x128xf32>
    %c0_3 = arith.constant 0 : index
    %c0_4 = arith.constant 0 : index
    %4 = vector.load %arg3[%c0_3, %c0_4] : memref<1x128xf32, #tpu.memory_space<vmem>>, vector<1x128xf32>
    %5 = vector.broadcast %4 : vector<1x128xf32> to vector<16x128xf32>
    %6 = arith.addf %3, %5 : vector<16x128xf32>
    %cst_5 = arith.constant 0.000000e+00 : f32
    %7 = vector.broadcast %cst_5 : f32 to vector<16x128xf32>
    %8 = arith.maximumf %6, %7 : vector<16x128xf32>
    %9 = arith.truncf %8 : vector<16x128xf32> to vector<16x128xbf16>
    %c0_6 = arith.constant 0 : index
    %c0_7 = arith.constant 0 : index
    %10 = vector.load %arg4[%c0_6, %c0_7] : memref<128x128xbf16, #tpu.memory_space<vmem>>, vector<128x128xbf16>
    %cst_8 = arith.constant dense<0.000000e+00> : vector<16x128xf32>
    %11 = tpu.matmul %9, %10, %cst_8 {dimension_numbers = #tpu.dot_dimension_numbers<[1], [0], [0], [1], [0, 0, 1, 1], [], []>} : vector<16x128xbf16>, vector<128x128xbf16>, vector<16x128xf32> -> vector<16x128xf32>
    %c0_9 = arith.constant 0 : index
    %c0_10 = arith.constant 0 : index
    %12 = vector.load %arg5[%c0_9, %c0_10] : memref<1x128xf32, #tpu.memory_space<vmem>>, vector<1x128xf32>
    %13 = vector.broadcast %12 : vector<1x128xf32> to vector<16x128xf32>
    %14 = arith.addf %11, %13 : vector<16x128xf32>
    %cst_11 = arith.constant 0.000000e+00 : f32
    %15 = vector.broadcast %cst_11 : f32 to vector<16x128xf32>
    %16 = arith.maximumf %14, %15 : vector<16x128xf32>
    %17 = arith.truncf %16 : vector<16x128xf32> to vector<16x128xbf16>
    %c0_12 = arith.constant 0 : index
    %c0_13 = arith.constant 0 : index
    %18 = vector.load %arg6[%c0_12, %c0_13] : memref<128x128xbf16, #tpu.memory_space<vmem>>, vector<128x128xbf16>
    %cst_14 = arith.constant dense<0.000000e+00> : vector<16x128xf32>
    %19 = tpu.matmul %17, %18, %cst_14 {dimension_numbers = #tpu.dot_dimension_numbers<[1], [0], [0], [1], [0, 0, 1, 1], [], []>} : vector<16x128xbf16>, vector<128x128xbf16>, vector<16x128xf32> -> vector<16x128xf32>
    %c0_15 = arith.constant 0 : index
    %c0_16 = arith.constant 0 : index
    %20 = vector.load %arg7[%c0_15, %c0_16] : memref<1x128xf32, #tpu.memory_space<vmem>>, vector<1x128xf32>
    %21 = vector.broadcast %20 : vector<1x128xf32> to vector<16x128xf32>
    %22 = arith.addf %19, %21 : vector<16x128xf32>
    %23 = tpu.iota {dimensions = array<i32: 1>} : vector<16x128xi32>
    %c4_i32 = arith.constant 4 : i32
    %24 = vector.broadcast %c4_i32 : i32 to vector<16x128xi32>
    %25 = arith.cmpi slt, %23, %24 : vector<16x128xi32>
    %cst_17 = arith.constant 0xFF800000 : f32
    %26 = vector.broadcast %cst_17 : f32 to vector<16x128xf32>
    %27 = arith.select %25, %22, %26 : vector<16x128xi1>, vector<16x128xf32>
    %cst_18 = arith.constant dense<0xFF800000> : vector<16xf32>
    %28 = vector.multi_reduction <maximumf>, %27, %cst_18 [1] : vector<16x128xf32> to vector<16xf32>
    %29 = vector.shape_cast %28 : vector<16xf32> to vector<16x1xf32>
    %30 = vector.broadcast %29 : vector<16x1xf32> to vector<16x128xf32>
    %31 = arith.subf %22, %30 : vector<16x128xf32>
    %32 = math.exp %31 : vector<16x128xf32>
    %cst_19 = arith.constant 0.000000e+00 : f32
    %33 = vector.broadcast %cst_19 : f32 to vector<16x128xf32>
    %34 = arith.select %25, %32, %33 : vector<16x128xi1>, vector<16x128xf32>
    %cst_20 = arith.constant dense<0.000000e+00> : vector<16xf32>
    %35 = vector.multi_reduction <add>, %34, %cst_20 [1] : vector<16x128xf32> to vector<16xf32>
    %36 = vector.shape_cast %35 : vector<16xf32> to vector<16x1xf32>
    %37 = tpu.reciprocal %36 {approx = true} : vector<16x1xf32> -> vector<16x1xf32>
    %38 = vector.broadcast %37 : vector<16x1xf32> to vector<16x128xf32>
    %39 = arith.mulf %34, %38 : vector<16x128xf32>
    %40 = arith.select %25, %39, %22 : vector<16x128xi1>, vector<16x128xf32>
    %41 = arith.truncf %40 : vector<16x128xf32> to vector<16x128xbf16>
    %c0_21 = arith.constant 0 : index
    %c0_22 = arith.constant 0 : index
    %42 = vector.load %arg8[%c0_21, %c0_22] : memref<16x128xbf16, #tpu.memory_space<vmem>>, vector<16x128xbf16>
    tpu.vector_store %arg8[%c0_21, %c0_22], %41 {strides = array<i32>} : memref<16x128xbf16, #tpu.memory_space<vmem>>, vector<16x128xbf16>,
    return
  }
  func.func @transform_0(%arg0: i32) -> (i32, i32) {
    %c0_i32 = arith.constant 0 : i32
    %c0_i32_0 = arith.constant 0 : i32
    return %arg0, %c0_i32 : i32, i32
  }
  func.func @transform_1(%arg0: i32) -> (i32, i32) {
    %c0_i32 = arith.constant 0 : i32
    %c0_i32_0 = arith.constant 0 : i32
    %c0_i32_1 = arith.constant 0 : i32
    return %c0_i32, %c0_i32_0 : i32, i32
  }
  func.func @transform_2(%arg0: i32) -> (i32, i32) {
    %c0_i32 = arith.constant 0 : i32
    %c0_i32_0 = arith.constant 0 : i32
    %c0_i32_1 = arith.constant 0 : i32
    return %c0_i32, %c0_i32_0 : i32, i32
  }
  func.func @transform_3(%arg0: i32) -> (i32, i32) {
    %c0_i32 = arith.constant 0 : i32
    %c0_i32_0 = arith.constant 0 : i32
    %c0_i32_1 = arith.constant 0 : i32
    return %c0_i32, %c0_i32_0 : i32, i32
  }
  func.func @transform_4(%arg0: i32) -> (i32, i32) {
    %c0_i32 = arith.constant 0 : i32
    %c0_i32_0 = arith.constant 0 : i32
    %c0_i32_1 = arith.constant 0 : i32
    return %c0_i32, %c0_i32_0 : i32, i32
  }
  func.func @transform_5(%arg0: i32) -> (i32, i32) {
    %c0_i32 = arith.constant 0 : i32
    %c0_i32_0 = arith.constant 0 : i32
    %c0_i32_1 = arith.constant 0 : i32
    return %c0_i32, %c0_i32_0 : i32, i32
  }
  func.func @transform_6(%arg0: i32) -> (i32, i32) {
    %c0_i32 = arith.constant 0 : i32
    %c0_i32_0 = arith.constant 0 : i32
    %c0_i32_1 = arith.constant 0 : i32
    return %c0_i32, %c0_i32_0 : i32, i32
  }
  func.func @transform_7(%arg0: i32) -> (i32, i32) {
    %c0_i32 = arith.constant 0 : i32
    %c0_i32_0 = arith.constant 0 : i32
    return %arg0, %c0_i32 : i32, i32
  }
}

</mosaic_0001>

<llo_original>
// kernel: actor_critic_forward.1
$region0: #{actor_critic_forward.1}
  #allocation0 [shape = 'u32[]', space=smem, size = 0x4, offset = 0x4, fixed_abs, tag = 'smem constant byte address 0x4 - core index']
  #allocation1 [shape = 'u32[144,128]{1,0:T(1,128)}', space=vmem, size = 0x12000, scoped, tag = 'internal scratch']
  %s0 = inlined_call_operand.hbm [shape: f32[2,8], index: 0, kind: input, shape index: {}]
  %s1 = inlined_call_operand.vmem [shape: bf16[8,128], index: 1, kind: input, shape index: {}]
  %s2 = inlined_call_operand.vmem [shape: f32[1,128], index: 2, kind: input, shape index: {}]
  %s3 = inlined_call_operand.hbm [shape: bf16[128,128], index: 3, kind: input, shape index: {}]
  %s4 = inlined_call_operand.vmem [shape: f32[1,128], index: 4, kind: input, shape index: {}]
  %s5 = inlined_call_operand.hbm [shape: bf16[128,128], index: 5, kind: input, shape index: {}]
  %s6 = inlined_call_operand.vmem [shape: f32[1,128], index: 6, kind: input, shape index: {}]
  %s7 = inlined_call_operand.vmem [shape: bf16[2,128], index: 7, kind: output, shape index: {}]
  %s8 = sld [smem:[#allocation0]]
  $region80: #{actor_critic_forward.1} parent=0
    _
  %s10 = ssub.s32 1, %s8
  %s11 = scalar_select 0, %s10, %s8
  $region1: #{actor_critic_forward.1} parent=0
    #allocation2 [shape = 'u8[8192]{0}', space=vmem, size = 0x2000, scoped, tag = 'input window, operand 0, single buffered']
    #allocation3 [shape = 's32[1]{0}', space=sflag, size = 0x4, scoped, tag = 'scoped memory for actor_critic_forward.1']
    #allocation4 [shape = 'u8[32768]{0}', space=vmem, size = 0x8000, scoped, tag = 'input window, operand 3, single buffered']
    #allocation5 [shape = 's32[1]{0}', space=sflag, size = 0x4, scoped, tag = 'scoped memory for actor_critic_forward.1']
    #allocation6 [shape = 'u8[32768]{0}', space=vmem, size = 0x8000, scoped, tag = 'input window, operand 5, single buffered']
    #allocation7 [shape = 'u8[4096]{0}', space=vmem, size = 0x1000, scoped, tag = 'output window, operand 0, single buffered']
    %12 = vsyncpa [#allocation3], 0
    %13 = vsyncpa [#allocation5], 0
    // Predicated region
    $region2: #{actor_critic_forward.1} parent=1 // pred_check
      _
    $region3: #{actor_critic_forward.1} parent=1 // pred_check_branch
      %15 = sbr.rel (0) target = $region5
    $region4: #{actor_critic_forward.1} parent=1 // pred_region
      %s17 = ssub.s32 256, 32
      %18 = vsyncadd [#allocation3], %s17
      %s19 = sshll.u32 [#allocation2], 4
      %s20 = int_to_ptr.vmem [resolvable:$true] %s19
      %25 = dma.hbm_to_vmem [thread:$0]  %s0, 32, %s20, [#allocation3], 32, 32, 2
    $region5: #{actor_critic_forward.1} parent=1 // pred_fallthru
      _
    // Predicated region
    $region6: #{actor_critic_forward.1} parent=1 // pred_check
      _
    $region7: #{actor_critic_forward.1} parent=1 // pred_check_branch
      %27 = sbr.rel (0) target = $region9
    $region8: #{actor_critic_forward.1} parent=1 // pred_region
      _
    $region9: #{actor_critic_forward.1} parent=1 // pred_fallthru
      _
    // Predicated region
    $region10: #{actor_critic_forward.1} parent=1 // pred_check
      _
    $region11: #{actor_critic_forward.1} parent=1 // pred_check_branch
      %29 = sbr.rel (0) target = $region13
    $region12: #{actor_critic_forward.1} parent=1 // pred_region
      _
    $region13: #{actor_critic_forward.1} parent=1 // pred_fallthru
      _
    // Predicated region
    $region14: #{actor_critic_forward.1} parent=1 // pred_check
      _
    $region15: #{actor_critic_forward.1} parent=1 // pred_check_branch
      %31 = sbr.rel (0) target = $region17
    $region16: #{actor_critic_forward.1} parent=1 // pred_region
      %s33 = ssub.s32 1024, 1024
      %34 = vsyncadd [#allocation5], %s33
      %s35 = sshll.u32 [#allocation4], 4
      %s36 = int_to_ptr.vmem [resolvable:$true] %s35
      %41 = dma.hbm_to_vmem [thread:$0]  %s3, 1024, %s36, [#allocation5], 64, 64, 4
    $region17: #{actor_critic_forward.1} parent=1 // pred_fallthru
      _
    // Predicated region
    $region18: #{actor_critic_forward.1} parent=1 // pred_check
      _
    $region19: #{actor_critic_forward.1} parent=1 // pred_check_branch
      %43 = sbr.rel (0) target = $region21
    $region20: #{actor_critic_forward.1} parent=1 // pred_region
      _
    $region21: #{actor_critic_forward.1} parent=1 // pred_fallthru
      _
    // Predicated region
    $region22: #{actor_critic_forward.1} parent=1 // pred_check
      _
    $region23: #{actor_critic_forward.1} parent=1 // pred_check_branch
      %45 = sbr.rel (0) target = $region25
    $region24: #{actor_critic_forward.1} parent=1 // pred_region
      %s47 = ssub.s32 1024, 1024
      %48 = vsyncadd [#allocation5], %s47
      %s49 = sshll.u32 [#allocation6], 4
      %s50 = int_to_ptr.vmem [resolvable:$true] %s49
      %55 = dma.hbm_to_vmem [thread:$0]  %s5, 1024, %s50, [#allocation5], 64, 64, 4
    $region25: #{actor_critic_forward.1} parent=1 // pred_fallthru
      _
    // Predicated region
    $region26: #{actor_critic_forward.1} parent=1 // pred_check
      _
    $region27: #{actor_critic_forward.1} parent=1 // pred_check_branch
      %57 = sbr.rel (0) target = $region29
    $region28: #{actor_critic_forward.1} parent=1 // pred_region
      _
    $region29: #{actor_critic_forward.1} parent=1 // pred_fallthru
      _
    // Predicated region
    $region30: #{actor_critic_forward.1} parent=1 // pred_check
      _
    $region31: #{actor_critic_forward.1} parent=1 // pred_check_branch
      %59 = sbr.rel (0) target = $region33
    $region32: #{actor_critic_forward.1} parent=1 // pred_region
      %60 = dma.done [#allocation3], 256
    $region33: #{actor_critic_forward.1} parent=1 // pred_fallthru
      _
    // Predicated region
    $region34: #{actor_critic_forward.1} parent=1 // pred_check
      _
    $region35: #{actor_critic_forward.1} parent=1 // pred_check_branch
      %62 = sbr.rel (0) target = $region37
    $region36: #{actor_critic_forward.1} parent=1 // pred_region
      %63 = dma.done [#allocation5], 1024
    $region37: #{actor_critic_forward.1} parent=1 // pred_fallthru
      _
    // Predicated region
    $region38: #{actor_critic_forward.1} parent=1 // pred_check
      _
    $region39: #{actor_critic_forward.1} parent=1 // pred_check_branch
      %65 = sbr.rel (0) target = $region41
    $region40: #{actor_critic_forward.1} parent=1 // pred_region
      %66 = dma.done [#allocation5], 1024
    $region41: #{actor_critic_forward.1} parent=1 // pred_fallthru
      _
    %v68 = vld [vmem:[#allocation2] sm:$0xff]
    %v69 = vld [vmem:[#allocation2 + $0x8] sm:$0xff]
    %v70 = vpack.c.bf16 %v69, %v68
    %v71 = vld [vmem:[%s1] sm:$0xf]
    %v72 = vld [vmem:[%s2] sm:$0x1]
    %v74 = vlaneseq
    %v75 = vshrl.u32 %v74, 7
    %v76 = vsub.s32 0, %v75
    %v77 = vrot.slane %v72, %v76
    %vm79 = vcmask 64512
    %v81 = vsel %vm79, %v70, 0
    %vm83 = vcmask 1043456
    %v85 = vsel %vm83, %v71, 0
    %87 = vmatprep.subr.bf16.mxu0 0
    %88 = vmatpush1.bf16.msra.mxu0 %v85
    %89 = vmatprep.subr.bf16.mxu0 0
    %90 = vmatpush1.bf16.msra.mxu0 0
    %91 = vmatprep.subr.bf16.mxu0 0
    %92 = vmatpush1.bf16.msra.mxu0 0
    %93 = vmatprep.subr.bf16.mxu0 0
    %94 = vmatpush1.bf16.msra.mxu0 0
    %95 = vmatprep.subr.bf16.mxu0 0
    %96 = vmatpush1.bf16.msra.mxu0 0
    %97 = vmatprep.subr.bf16.mxu0 0
    %98 = vmatpush1.bf16.msra.mxu0 0
    %99 = vmatprep.subr.bf16.mxu0 0
    %100 = vmatpush1.bf16.msra.mxu0 0
    %101 = vmatprep.subr.bf16.mxu0 0
    %102 = vmatpush1.bf16.msra.mxu0 0
    %103 = vmatprep.subr.bf16.mxu0 0
    %104 = vmatpush1.bf16.msra.mxu0 0
    %105 = vmatprep.subr.bf16.mxu0 0
    %106 = vmatpush1.bf16.msra.mxu0 0
    %107 = vmatprep.subr.bf16.mxu0 0
    %108 = vmatpush1.bf16.msra.mxu0 0
    %109 = vmatprep.subr.bf16.mxu0 0
    %110 = vmatpush1.bf16.msra.mxu0 0
    %111 = vmatprep.subr.bf16.mxu0 0
    %112 = vmatpush1.bf16.msra.mxu0 0
    %113 = vmatprep.subr.bf16.mxu0 0
    %114 = vmatpush1.bf16.msra.mxu0 0
    %115 = vmatprep.subr.bf16.mxu0 0
    %116 = vmatpush1.bf16.msra.mxu0 0
    %117 = vmatprep.subr.bf16.mxu0 0
    %118 = vmatpush1.bf16.msra.mxu0 0
    %119 = vmatprep.mubr.bf16.mxu0 0
    %120 = vmatmul.mubr.bf16.gmra.mrb[0].mxu0 %v81
    %v121 = vpop.f32.mrb[0].mxu0
    %v122 = vadd.f32 %v77, %v121
    %v123 = vpop.f32.mrb[0].mxu0
    %v124 = vpop.f32.mrb[0].mxu0
    %v125 = vadd.f32 %v77, %v124
    %v126 = vpop.f32.mrb[0].mxu0
    %127 = vdwg.mxu0
    %v128 = vmax.f32 %v122, 0.0
    %v129 = vmax.f32 %v125, 0.0
    %v130 = vpack.c.bf16 %v129, %v128
    %v131 = vld [vmem:[#allocation4] sm:$0xf]
    %v132 = vld [vmem:[#allocation4 + $0x4] sm:$0xf]
    %v133 = vld [vmem:[#allocation4 + $0x8] sm:$0xf]
    %v134 = vld [vmem:[#allocation4 + $0xc] sm:$0xf]
    %v135 = vld [vmem:[#allocation4 + $0x10] sm:$0xf]
    %v136 = vld [vmem:[#allocation4 + $0x14] sm:$0xf]
    %v137 = vld [vmem:[#allocation4 + $0x18] sm:$0xf]
    %v138 = vld [vmem:[#allocation4 + $0x1c] sm:$0xf]
    %v139 = vld [vmem:[#allocation4 + $0x20] sm:$0xf]
    %v140 = vld [vmem:[#allocation4 + $0x24] sm:$0xf]
    %v141 = vld [vmem:[#allocation4 + $0x28] sm:$0xf]
    %v142 = vld [vmem:[#allocation4 + $0x2c] sm:$0xf]
    %v143 = vld [vmem:[#allocation4 + $0x30] sm:$0xf]
    %v144 = vld [vmem:[#allocation4 + $0x34] sm:$0xf]
    %v145 = vld [vmem:[#allocation4 + $0x38] sm:$0xf]
    %v146 = vld [vmem:[#allocation4 + $0x3c] sm:$0xf]
    %v147 = vld [vmem:[%s4] sm:$0x1]
    %v149 = vlaneseq
    %v150 = vshrl.u32 %v149, 7
    %v151 = vsub.s32 0, %v150
    %v152 = vrot.slane %v147, %v151
    %v170 = vunpack.c.l.b16 %v131
    %v171 = vunpack.c.l.b16 %v132
    %v172 = vunpack.c.l.b16 %v133
    %v173 = vunpack.c.l.b16 %v134
    %v174 = vunpack.c.l.b16 %v135
    %v175 = vunpack.c.l.b16 %v136
    %v176 = vunpack.c.l.b16 %v137
    %v177 = vunpack.c.l.b16 %v138
    %v178 = vunpack.c.l.b16 %v139
    %v179 = vunpack.c.l.b16 %v140
    %v180 = vunpack.c.l.b16 %v141
    %v181 = vunpack.c.l.b16 %v142
    %v182 = vunpack.c.l.b16 %v143
    %v183 = vunpack.c.l.b16 %v144
    %v184 = vunpack.c.l.b16 %v145
    %v185 = vunpack.c.l.b16 %v146
    %v186 = vpack.c.b16 %v171, %v170
    %v187 = vpack.c.b16 %v173, %v172
    %v188 = vpack.c.b16 %v175, %v174
    %v189 = vpack.c.b16 %v177, %v176
    %v190 = vpack.c.b16 %v179, %v178
    %v191 = vpack.c.b16 %v181, %v180
    %v192 = vpack.c.b16 %v183, %v182
    %v193 = vpack.c.b16 %v185, %v184
    %202 = vmatprep.subr.bf16.mxu0 0
    %203 = vmatpush1.bf16.msra.mxu0 %v186
    %204 = vmatprep.subr.bf16.mxu0 0
    %205 = vmatpush1.bf16.msra.mxu0 %v187
    %206 = vmatprep.subr.bf16.mxu0 0
    %207 = vmatpush1.bf16.msra.mxu0 %v188
    %208 = vmatprep.subr.bf16.mxu0 0
    %209 = vmatpush1.bf16.msra.mxu0 %v189
    %210 = vmatprep.subr.bf16.mxu0 0
    %211 = vmatpush1.bf16.msra.mxu0 %v190
    %212 = vmatprep.subr.bf16.mxu0 0
    %213 = vmatpush1.bf16.msra.mxu0 %v191
    %214 = vmatprep.subr.bf16.mxu0 0
    %215 = vmatpush1.bf16.msra.mxu0 %v192
    %216 = vmatprep.subr.bf16.mxu0 0
    %217 = vmatpush1.bf16.msra.mxu0 %v193
    %218 = vmatprep.subr.bf16.mxu0 0
    %219 = vmatpush1.bf16.msra.mxu0 0
    %220 = vmatprep.subr.bf16.mxu0 0
    %221 = vmatpush1.bf16.msra.mxu0 0
    %222 = vmatprep.subr.bf16.mxu0 0
    %223 = vmatpush1.bf16.msra.mxu0 0
    %224 = vmatprep.subr.bf16.mxu0 0
    %225 = vmatpush1.bf16.msra.mxu0 0
    %226 = vmatprep.subr.bf16.mxu0 0
    %227 = vmatpush1.bf16.msra.mxu0 0
    %228 = vmatprep.subr.bf16.mxu0 0
    %229 = vmatpush1.bf16.msra.mxu0 0
    %230 = vmatprep.subr.bf16.mxu0 0
    %231 = vmatpush1.bf16.msra.mxu0 0
    %232 = vmatprep.subr.bf16.mxu0 0
    %233 = vmatpush1.bf16.msra.mxu0 0
    %234 = vmatprep.mubr.bf16.mxu0 0
    %235 = vmatmul.mubr.bf16.gmra.mrb[0].mxu0 %v130
    %v236 = vpop.f32.mrb[0].mxu0
    %v237 = vadd.f32 %v152, %v236
    %v238 = vpop.f32.mrb[0].mxu0
    %v239 = vpop.f32.mrb[0].mxu0
    %v240 = vadd.f32 %v152, %v239
    %v241 = vpop.f32.mrb[0].mxu0
    %242 = vdwg.mxu0
    %v243 = vmax.f32 %v237, 0.0
    %v244 = vmax.f32 %v240, 0.0
    %v245 = vpack.c.bf16 %v244, %v243
    %v246 = vld [vmem:[#allocation6] sm:$0xf]
    %v247 = vld [vmem:[#allocation6 + $0x4] sm:$0xf]
    %v248 = vld [vmem:[#allocation6 + $0x8] sm:$0xf]
    %v249 = vld [vmem:[#allocation6 + $0xc] sm:$0xf]
    %v250 = vld [vmem:[#allocation6 + $0x10] sm:$0xf]
    %v251 = vld [vmem:[#allocation6 + $0x14] sm:$0xf]
    %v252 = vld [vmem:[#allocation6 + $0x18] sm:$0xf]
    %v253 = vld [vmem:[#allocation6 + $0x1c] sm:$0xf]
    %v254 = vld [vmem:[#allocation6 + $0x20] sm:$0xf]
    %v255 = vld [vmem:[#allocation6 + $0x24] sm:$0xf]
    %v256 = vld [vmem:[#allocation6 + $0x28] sm:$0xf]
    %v257 = vld [vmem:[#allocation6 + $0x2c] sm:$0xf]
    %v258 = vld [vmem:[#allocation6 + $0x30] sm:$0xf]
    %v259 = vld [vmem:[#allocation6 + $0x34] sm:$0xf]
    %v260 = vld [vmem:[#allocation6 + $0x38] sm:$0xf]
    %v261 = vld [vmem:[#allocation6 + $0x3c] sm:$0xf]
    %v262 = vld [vmem:[%s6] sm:$0x1]
    %v264 = vlaneseq
    %v265 = vshrl.u32 %v264, 7
    %v266 = vsub.s32 0, %v265
    %v267 = vrot.slane %v262, %v266
    %v285 = vunpack.c.l.b16 %v246
    %v286 = vunpack.c.l.b16 %v247
    %v287 = vunpack.c.l.b16 %v248
    %v288 = vunpack.c.l.b16 %v249
    %v289 = vunpack.c.l.b16 %v250
    %v290 = vunpack.c.l.b16 %v251
    %v291 = vunpack.c.l.b16 %v252
    %v292 = vunpack.c.l.b16 %v253
    %v293 = vunpack.c.l.b16 %v254
    %v294 = vunpack.c.l.b16 %v255
    %v295 = vunpack.c.l.b16 %v256
    %v296 = vunpack.c.l.b16 %v257
    %v297 = vunpack.c.l.b16 %v258
    %v298 = vunpack.c.l.b16 %v259
    %v299 = vunpack.c.l.b16 %v260
    %v300 = vunpack.c.l.b16 %v261
    %v301 = vpack.c.b16 %v286, %v285
    %v302 = vpack.c.b16 %v288, %v287
    %v303 = vpack.c.b16 %v290, %v289
    %v304 = vpack.c.b16 %v292, %v291
    %v305 = vpack.c.b16 %v294, %v293
    %v306 = vpack.c.b16 %v296, %v295
    %v307 = vpack.c.b16 %v298, %v297
    %v308 = vpack.c.b16 %v300, %v299
    %317 = vmatprep.subr.bf16.mxu0 0
    %318 = vmatpush1.bf16.msra.mxu0 %v301
    %319 = vmatprep.subr.bf16.mxu0 0
    %320 = vmatpush1.bf16.msra.mxu0 %v302
    %321 = vmatprep.subr.bf16.mxu0 0
    %322 = vmatpush1.bf16.msra.mxu0 %v303
    %323 = vmatprep.subr.bf16.mxu0 0
    %324 = vmatpush1.bf16.msra.mxu0 %v304
    %325 = vmatprep.subr.bf16.mxu0 0
    %326 = vmatpush1.bf16.msra.mxu0 %v305
    %327 = vmatprep.subr.bf16.mxu0 0
    %328 = vmatpush1.bf16.msra.mxu0 %v306
    %329 = vmatprep.subr.bf16.mxu0 0
    %330 = vmatpush1.bf16.msra.mxu0 %v307
    %331 = vmatprep.subr.bf16.mxu0 0
    %332 = vmatpush1.bf16.msra.mxu0 %v308
    %333 = vmatprep.subr.bf16.mxu0 0
    %334 = vmatpush1.bf16.msra.mxu0 0
    %335 = vmatprep.subr.bf16.mxu0 0
    %336 = vmatpush1.bf16.msra.mxu0 0
    %337 = vmatprep.subr.bf16.mxu0 0
    %338 = vmatpush1.bf16.msra.mxu0 0
    %339 = vmatprep.subr.bf16.mxu0 0
    %340 = vmatpush1.bf16.msra.mxu0 0
    %341 = vmatprep.subr.bf16.mxu0 0
    %342 = vmatpush1.bf16.msra.mxu0 0
    %343 = vmatprep.subr.bf16.mxu0 0
    %344 = vmatpush1.bf16.msra.mxu0 0
    %345 = vmatprep.subr.bf16.mxu0 0
    %346 = vmatpush1.bf16.msra.mxu0 0
    %347 = vmatprep.subr.bf16.mxu0 0
    %348 = vmatpush1.bf16.msra.mxu0 0
    %349 = vmatprep.mubr.bf16.mxu0 0
    %350 = vmatmul.mubr.bf16.gmra.mrb[0].mxu0 %v245
    %v351 = vpop.f32.mrb[0].mxu0
    %v352 = vadd.f32 %v267, %v351
    %v353 = vpop.f32.mrb[0].mxu0
    %v354 = vpop.f32.mrb[0].mxu0
    %v355 = vadd.f32 %v267, %v354
    %v356 = vpop.f32.mrb[0].mxu0
    %357 = vdwg.mxu0
    %v358 = vlaneseq
    %v359 = vand.u32 %v358, 127
    %vm360 = vcmp.lt.s32.totalorder %v359, 4
    %v361 = vsel %vm360, %v352, -inf
    %v362 = vsel %vm360, %v355, -inf
    %363 = vmax.xlane.f32.xlu0 %v361
    %v364 = vpop.xlane.xlu0 %363
    %365 = vmax.xlane.f32.xlu0 %v362
    %v366 = vpop.xlane.xlu0 %365
    %v367 = vsub.f32 %v352, %v364
    %v368 = vsub.f32 %v355, %v366
    %v369 = vmul.f32 %v367, 1.442695
    %v370 = vpow.pop %v369
    %v371 = vmul.f32 %v368, 1.442695
    %v372 = vpow.pop %v371
    %v373 = vsel %vm360, %v370, 0.0
    %v374 = vsel %vm360, %v372, 0.0
    %375 = vadd.xlane.f32.xlu0 %v373
    %v376 = vpop.xlane.xlu0 %375
    %377 = vadd.xlane.f32.xlu0 %v374
    %v378 = vpop.xlane.xlu0 %377
    %v379 = vrcp.pop %v376
    %v380 = vrcp.pop %v378
    %v381 = vmul.f32 %v373, %v379
    %v382 = vmul.f32 %v374, %v380
    %v383 = vsel %vm360, %v381, %v352
    %v384 = vsel %vm360, %v382, %v355
    %v385 = vpack.c.bf16 %v384, %v383
    %v387 = vcombine.high %v385, %v385
    %v389 = vunpack.c.l.s4 1966171168
    %v390 = vunpack.c.0.s8 %v389
    %v391 = vlaneseq
    %v392 = vshrl.u32 %v391, 7
    %v393 = vsub.s32 %v390, %v392
    %v394 = vrot.slane %v385, %v393
    %v396 = vunpack.c.l.s4 1966171168
    %v397 = vunpack.c.0.s8 %v396
    %v398 = vlaneseq
    %v399 = vshrl.u32 %v398, 7
    %v400 = vsub.s32 %v397, %v399
    %v401 = vrot.slane %v387, %v400
    %v402 = vcombine.high %v394, %v394
    %v403 = vcombine.high %v401, %v401
    %v405 = vunpack.c.l.s4 1966171168
    %v406 = vunpack.c.0.s8 %v405
    %v407 = vlaneseq
    %v408 = vshrl.u32 %v407, 7
    %v409 = vsub.s32 %v406, %v408
    %v410 = vrot.slane %v394, %v409
    %v412 = vunpack.c.l.s4 1966171168
    %v413 = vunpack.c.0.s8 %v412
    %v414 = vlaneseq
    %v415 = vshrl.u32 %v414, 7
    %v416 = vsub.s32 %v413, %v415
    %v417 = vrot.slane %v401, %v416
    %v419 = vunpack.c.l.s4 1966171168
    %v420 = vunpack.c.0.s8 %v419
    %v421 = vlaneseq
    %v422 = vshrl.u32 %v421, 7
    %v423 = vsub.s32 %v420, %v422
    %v424 = vrot.slane %v402, %v423
    %v426 = vunpack.c.l.s4 1966171168
    %v427 = vunpack.c.0.s8 %v426
    %v428 = vlaneseq
    %v429 = vshrl.u32 %v428, 7
    %v430 = vsub.s32 %v427, %v429
    %v431 = vrot.slane %v403, %v430
    %v432 = vcombine.high %v410, %v410
    %v433 = vcombine.high %v417, %v417
    %v434 = vcombine.high %v424, %v424
    %v435 = vcombine.high %v431, %v431
    %444 = vst [vmem:[#allocation7] sm:$0x1] %v410
    %445 = vst [vmem:[#allocation7 + $0x1] sm:$0x1] %v424
    %446 = vst [vmem:[#allocation7 + $0x2] sm:$0x1] %v432
    %447 = vst [vmem:[#allocation7 + $0x3] sm:$0x1] %v434
    %448 = vst [vmem:[#allocation7 + $0x4] sm:$0x1] %v417
    %449 = vst [vmem:[#allocation7 + $0x5] sm:$0x1] %v431
    %450 = vst [vmem:[#allocation7 + $0x6] sm:$0x1] %v433
    %451 = vst [vmem:[#allocation7 + $0x7] sm:$0x1] %v435
    // Predicated region
    $region42: #{actor_critic_forward.1} parent=1 // pred_check
      _
    $region43: #{actor_critic_forward.1} parent=1 // pred_check_branch
      %453 = sbr.rel (0) target = $region45
    $region44: #{actor_critic_forward.1} parent=1 // pred_region
      // Predicated region
      $region46: #{actor_critic_forward.1} parent=44 // pred_check
        _
      $region47: #{actor_critic_forward.1} parent=44 // pred_check_branch
        %455 = sbr.rel (0) target = $region49
      $region48: #{actor_critic_forward.1} parent=44 // pred_region
        // Predicated region
        $region50: #{actor_critic_forward.1} parent=48 // pred_check
          _
        $region51: #{actor_critic_forward.1} parent=48 // pred_check_branch
          %457 = sbr.rel target = $region53
        $region52: #{actor_critic_forward.1} parent=48 // pred_region
          // Predicated region
          $region65: #{actor_critic_forward.1} parent=52 // pred_check
            _
          $region66: #{actor_critic_forward.1} parent=52 // pred_check_branch
            %472 = sbr.rel (0) target = $region68
          $region67: #{actor_critic_forward.1} parent=52 // pred_region
            loop: start=0, step=1, limit=1
            $region69: #{actor_critic_forward.1} parent=67 // loop_pre_header
              _
            $region70: #{actor_critic_forward.1} parent=67 // loop_header
              %s475 = sphi 0, %s479
              %p476 = scmp.ge.s32.totalorder %s475, 1
              %s480 = sphi [#allocation7], [#allocation7]
              %s481 = sphi %s7, %s7
            $region71: #{actor_critic_forward.1} parent=67 // loop_header_branch
              %478 = sbr.rel (%p476) target = $region75
            $region72: #{actor_critic_forward.1} parent=67 // loop_body
              %v482 = vld [vmem:[%s480] sm:$0x1]
              %483 = vst [vmem:[%s481] sm:$0x1] %v482
            $region73: #{actor_critic_forward.1} parent=67 // loop_footer
              %s479 = sadd.s32 1, %s475
            $region74: #{actor_critic_forward.1} parent=67 // loop_footer_branch
              %474 = sbr.rel target = $region70
            $region75: #{actor_critic_forward.1} parent=67 // loop_exit
              _
          $region68: #{actor_critic_forward.1} parent=52 // pred_fallthru
            _
        $region53: #{actor_critic_forward.1} parent=48 // pred_fallthru
          _
        // Predicated region
        $region54: #{actor_critic_forward.1} parent=48 // pred_check
          _
        $region55: #{actor_critic_forward.1} parent=48 // pred_check_branch
          %459 = sbr.rel (0) target = $region57
        $region56: #{actor_critic_forward.1} parent=48 // pred_region
          loop: start=0, step=1, limit=1
          $region58: #{actor_critic_forward.1} parent=56 // loop_pre_header
            _
          $region59: #{actor_critic_forward.1} parent=56 // loop_header
            %s462 = sphi 0, %s466
            %p463 = scmp.ge.s32.totalorder %s462, 1
            %s467 = sphi [#allocation7], [#allocation7]
            %s468 = sphi %s7, %s7
          $region60: #{actor_critic_forward.1} parent=56 // loop_header_branch
            %465 = sbr.rel (%p463) target = $region64
          $region61: #{actor_critic_forward.1} parent=56 // loop_body
            %v469 = vld [vmem:[%s467] sm:$0x1]
            %470 = vst [vmem:[%s468] sm:$0x1] %v469
          $region62: #{actor_critic_forward.1} parent=56 // loop_footer
            %s466 = sadd.s32 1, %s462
          $region63: #{actor_critic_forward.1} parent=56 // loop_footer_branch
            %461 = sbr.rel target = $region59
          $region64: #{actor_critic_forward.1} parent=56 // loop_exit
            _
        $region57: #{actor_critic_forward.1} parent=48 // pred_fallthru
          _
      $region49: #{actor_critic_forward.1} parent=44 // pred_fallthru
        _
      %484 = vnop
    $region45: #{actor_critic_forward.1} parent=1 // pred_fallthru
      _
    // Predicated region
    $region76: #{actor_critic_forward.1} parent=1 // pred_check
      _
    $region77: #{actor_critic_forward.1} parent=1 // pred_check_branch
      %486 = sbr.rel (0) target = $region79
    $region78: #{actor_critic_forward.1} parent=1 // pred_region
      _
    $region79: #{actor_critic_forward.1} parent=1 // pred_fallthru
      _
    %487 = vsyncpa [#allocation3], 1
    %488 = vsyncpa [#allocation5], 1

</llo_original>
